<compile_context>
chip_gen: v7x
topology: tpu7x:2x2x1
jax: 0.10.0
libtpu: 0.0.40
codegen_flags: <defaults>
</compile_context>

<pallas_src>
import functools

import jax
import jax.numpy as jnp
from jax.experimental import pallas as pl
from jax.experimental.pallas import tpu as pltpu

LANE = 128  # lane-dense output slab width


def _round_up(x, m):
    return ((x + m - 1) // m) * m


def _pick_tile(n_pad, candidates):
    for c in candidates:
        if c <= n_pad and n_pad % c == 0:
            return c
    return n_pad


def aggregate_kernel(adj_ref, dinv_ref, rhs_ref, bias_ref, o_ref, acc_ref,
                     *, apply_relu, tk):
    """K-tiled row block of: dinv_row * ((A+I) @ rhs_scaled) + bias [, relu]."""
    # adj_ref : (TM, TK)      bf16  raw (A + I) tile for (row tile i, k tile k)
    # dinv_ref: (TM, 1)       f32   deg^{-1/2} for these rows (constant over k)
    # rhs_ref : (n_pad, 128)  f32   resident dinv[:,None] * (X @ W), lane-padded
    # bias_ref: (1, 128)      f32   resident lane-padded bias
    # o_ref   : (TM, 128)           written once, on the last k step
    # acc_ref : (TM, 128)     f32   VMEM accumulator scratch
    k = pl.program_id(1)

    @pl.when(k == 0)
    def _():
        acc_ref[...] = jnp.zeros_like(acc_ref)

    off = pl.multiple_of(k * tk, tk)
    rhs_blk = rhs_ref[pl.ds(off, tk), :]                     # resident RHS slice
    acc_ref[...] += jnp.dot(adj_ref[...], rhs_blk,
                            preferred_element_type=jnp.float32)   # MXU, f32 acc

    @pl.when(k == pl.num_programs(1) - 1)
    def _():
        out = dinv_ref[...] * acc_ref[...] + bias_ref[...]   # VPU epilogue
        if apply_relu:
            out = jnp.maximum(out, 0.0)
        o_ref[...] = out.astype(o_ref.dtype)                 # lane-dense store


def _aggregate(adj_bf16, dinv_col, rhs_f32, bias_pad, *, relu, tm, tk, out_dtype):
    n_pad = adj_bf16.shape[0]
    grid = (n_pad // tm, n_pad // tk)
    return pl.pallas_call(
        functools.partial(aggregate_kernel, apply_relu=relu, tk=tk),
        out_shape=jax.ShapeDtypeStruct((n_pad, LANE), out_dtype),
        grid_spec=pltpu.PrefetchScalarGridSpec(
            num_scalar_prefetch=0,
            grid=grid,
            in_specs=[
                pl.BlockSpec((tm, tk), lambda i, k: (i, k)),     # adj tile (only big stream)
                pl.BlockSpec((tm, 1), lambda i, k: (i, 0)),      # dinv rows (const over k)
                pl.BlockSpec((n_pad, LANE), lambda i, k: (0, 0)),  # resident RHS
                pl.BlockSpec((1, LANE), lambda i, k: (0, 0)),      # resident bias
            ],
            out_specs=pl.BlockSpec((tm, LANE), lambda i, k: (i, 0)),
            scratch_shapes=[pltpu.VMEM((tm, LANE), jnp.float32)],
        ),
        compiler_params=pltpu.CompilerParams(
            dimension_semantics=("parallel", "arbitrary"),
            vmem_limit_bytes=48 * 1024 * 1024,   # <= v7x physical, headroom on v5e/v6e
        ),
    )(adj_bf16, dinv_col, rhs_f32, bias_pad)


def precompute_graph(edge_index, num_nodes):
    """O(E) degree + direct-bf16 dense (A+I).  Call once per static graph and reuse."""
    n = int(num_nodes)
    n_pad = _round_up(max(n, 1), 128)
    tm = _pick_tile(n_pad, (512, 256, 128))
    tk = _pick_tile(n_pad, (1024, 512, 256, 128))

    src = edge_index[0].astype(jnp.int32)
    dst = edge_index[1].astype(jnp.int32)
    idx = jnp.arange(n, dtype=jnp.int32)

    # In-degree + self-loop via O(E) index_add — no dense O(N^2) reduction.
    deg = jnp.zeros((n_pad,), jnp.float32).at[dst].add(1.0).at[idx].add(1.0)
    dinv = jnp.where(deg > 0, jax.lax.rsqrt(deg), 0.0)       # padded rows -> 0
    dinv_col = dinv[:, None]                                  # [n_pad, 1] f32

    # Dense (A + I), built directly in bf16 (0/1 counts are exact); self-loops
    # only for real nodes so padded rows/cols stay zero.
    adj = jnp.zeros((n_pad, n_pad), jnp.bfloat16)
    adj = adj.at[dst, src].add(1.0)                           # A[dst, src] (src -> dst)
    adj = adj.at[idx, idx].add(1.0)                           # + I

    return {"adj": adj, "dinv_col": dinv_col, "n": n, "n_pad": n_pad,
            "tm": tm, "tk": tk}


def dqn_gcn_forward(x, graph, params):
    """x: [N, F] float32; graph: precompute_graph(...) output; params: w1,b1,w2,b2."""
    adj, dinv_col = graph["adj"], graph["dinv_col"]
    n, n_pad, tm, tk = graph["n"], graph["n_pad"], graph["tm"], graph["tk"]
    w1, b1, w2, b2 = params["w1"], params["b1"], params["w2"], params["b2"]
    hidden = w1.shape[1]
    num_actions = w2.shape[1]
    assert hidden <= LANE and num_actions <= LANE
    assert x.shape[0] == n

    # ---- Layer 1: tiny feature matmul hoisted out of the tiled kernel ----
    xw1 = jnp.dot(x, w1)                                                # [N, 16]
    xw1 = jnp.pad(xw1, ((0, n_pad - n), (0, LANE - hidden)))            # lane-pad
    rhs1 = dinv_col * xw1                                               # fold col-norm (f32)
    b1_pad = jnp.pad(b1.reshape(1, -1),
                     ((0, 0), (0, LANE - hidden))).astype(jnp.float32)
    # Layer-1 output in bf16: it is immediately consumed by a tiny matmul below.
    h1_pad = _aggregate(adj, dinv_col, rhs1, b1_pad, relu=True,
                        tm=tm, tk=tk, out_dtype=jnp.bfloat16)
    # NOTE: padded rows of h1_pad hold relu(b1); harmless because dinv_col == 0
    # there zeroes rhs2, and the final slice drops those rows.

    # ---- Layer 2 ----
    hw2 = jnp.dot(h1_pad[:, :hidden].astype(jnp.float32), w2)           # [n_pad, A]
    hw2 = jnp.pad(hw2, ((0, 0), (0, LANE - num_actions)))
    rhs2 = dinv_col * hw2
    b2_pad = jnp.pad(b2.reshape(1, -1),
                     ((0, 0), (0, LANE - num_actions))).astype(jnp.float32)
    out_pad = _aggregate(adj, dinv_col, rhs2, b2_pad, relu=False,
                         tm=tm, tk=tk, out_dtype=jnp.float32)

    return out_pad[:n, :num_actions]


def init_params(num_features, num_actions, hidden=16, seed=0):
    key = jax.random.PRNGKey(seed)
    k1, k2 = jax.random.split(key)
    w1 = jax.random.normal(k1, (num_features, hidden), jnp.float32) * (
        1.0 / jnp.sqrt(jnp.float32(num_features)))
    w2 = jax.random.normal(k2, (hidden, num_actions), jnp.float32) * (
        1.0 / jnp.sqrt(jnp.float32(hidden)))
    b1 = jnp.zeros((1, hidden), jnp.float32)
    b2 = jnp.zeros((1, num_actions), jnp.float32)
    return {"w1": w1, "b1": b1, "w2": w2, "b2": b2}


def _reference_forward(x, edge_index, params):
    """Pure-JAX f32 reference (dense A_hat) for a tolerance check."""
    n = x.shape[0]
    src, dst = edge_index[0], edge_index[1]
    adj = jnp.zeros((n, n), jnp.float32).at[dst, src].add(1.0) + jnp.eye(n)
    deg = adj.sum(axis=1)
    dinv = jnp.where(deg > 0, 1.0 / jnp.sqrt(deg), 0.0)
    a_hat = dinv[:, None] * adj * dinv[None, :]
    h1 = jnp.maximum(a_hat @ (x @ params["w1"]) + params["b1"], 0.0)
    return a_hat @ (h1 @ params["w2"]) + params["b2"]


if __name__ == "__main__":
    num_nodes = 8
    num_features = 4
    num_actions = 4

    key = jax.random.PRNGKey(0)
    x = jax.random.normal(key, (num_nodes, num_features), jnp.float32)

    # Undirected ring graph, both directions listed (PyG convention).
    s = jnp.arange(num_nodes, dtype=jnp.int32)
    d = (s + 1) % num_nodes
    edge_index = jnp.stack(
        [jnp.concatenate([s, d]), jnp.concatenate([d, s])], axis=0)

    params = init_params(num_features, num_actions)

    # Graph tensors are precomputed once and reused across forward calls
    # (edge_index is static in the DQN use case).
    graph = precompute_graph(edge_index, num_nodes)

    out = dqn_gcn_forward(x, graph, params)
    jax.block_until_ready(out)

    assert out.shape == (num_nodes, num_actions)
    assert out.dtype == jnp.float32

    # adj is bf16 (exact counts) but RHS/accumulation are f32 -> tight-ish tolerance.
    ref = _reference_forward(x, edge_index, params)
    assert jnp.allclose(out, ref, atol=5e-2, rtol=5e-2), (out, ref)

    print("KERNEL_OK")
</pallas_src>

<mosaic_0001>
module attributes {stable_mosaic.version = 11 : i64} {
  func.func @aggregate_kernel(%arg0: i32, %arg1: i32, %arg2: memref<128x128xbf16, #tpu.memory_space<vmem>>, %arg3: memref<128x1xf32, #tpu.memory_space<vmem>>, %arg4: memref<128x128xf32, #tpu.memory_space<vmem>>, %arg5: memref<1x128xf32, #tpu.memory_space<vmem>>, %arg6: memref<128x128xbf16, #tpu.memory_space<vmem>>, %arg7: memref<128x128xf32, #tpu.memory_space<vmem>>) attributes {dimension_semantics = [#tpu.dimension_semantics<parallel>, #tpu.dimension_semantics<arbitrary>], iteration_bounds = array<i64: 1, 1>, scalar_prefetch = 0 : i64, scratch_operands = 1 : i64, tpu.core_type = #tpu.core_type<tc>, window_params = [{transform_indices = @transform_0, window_bounds = array<i64: 128, 128>}, {transform_indices = @transform_1, window_bounds = array<i64: 128, 1>}, {pipeline_mode = #tpu.pipeline_mode<synchronous>, transform_indices = @transform_2, window_bounds = array<i64: 128, 128>}, {pipeline_mode = #tpu.pipeline_mode<synchronous>, transform_indices = @transform_3, window_bounds = array<i64: 1, 128>}, {transform_indices = @transform_4, window_bounds = array<i64: 128, 128>}]} {
    %c0_i32 = arith.constant 0 : i32
    %0 = arith.cmpi eq, %arg1, %c0_i32 : i32
    %1 = arith.extui %0 : i1 to i32
    %c0_i32_0 = arith.constant 0 : i32
    %2 = arith.cmpi ne, %1, %c0_i32_0 : i32
    scf.if %2 {
      %cst_9 = arith.constant 0.000000e+00 : f32
      %15 = vector.broadcast %cst_9 : f32 to vector<128x128xf32>
      %c0_10 = arith.constant 0 : index
      %c0_11 = arith.constant 0 : index
      %16 = vector.load %arg7[%c0_10, %c0_11] : memref<128x128xf32, #tpu.memory_space<vmem>>, vector<128x128xf32>
      tpu.vector_store %arg7[%c0_10, %c0_11], %15 {strides = array<i32>} : memref<128x128xf32, #tpu.memory_space<vmem>>, vector<128x128xf32>,
    } else {
    }
    %c128_i32 = arith.constant 128 : i32
    %3 = arith.muli %arg1, %c128_i32 : i32
    %4 = tpu.assume_multiple %3, 128 : i32
    %5 = arith.index_cast %4 : i32 to index
    %c0 = arith.constant 0 : index
    %6 = vector.load %arg4[%5, %c0] : memref<128x128xf32, #tpu.memory_space<vmem>>, vector<128x128xf32>
    %c0_1 = arith.constant 0 : index
    %c0_2 = arith.constant 0 : index
    %7 = vector.load %arg7[%c0_1, %c0_2] : memref<128x128xf32, #tpu.memory_space<vmem>>, vector<128x128xf32>
    %c0_3 = arith.constant 0 : index
    %c0_4 = arith.constant 0 : index
    %8 = vector.load %arg2[%c0_3, %c0_4] : memref<128x128xbf16, #tpu.memory_space<vmem>>, vector<128x128xbf16>
    %cst = arith.constant dense<0.000000e+00> : vector<128x128xf32>
    %9 = tpu.matmul %8, %6, %cst {dimension_numbers = #tpu.dot_dimension_numbers<[1], [0], [0], [1], [0, 0, 1, 1], [], []>} : vector<128x128xbf16>, vector<128x128xf32>, vector<128x128xf32> -> vector<128x128xf32>
    %10 = arith.addf %7, %9 : vector<128x128xf32>
    %c0_5 = arith.constant 0 : index
    %c0_6 = arith.constant 0 : index
    %11 = vector.load %arg7[%c0_5, %c0_6] : memref<128x128xf32, #tpu.memory_space<vmem>>, vector<128x128xf32>
    tpu.vector_store %arg7[%c0_5, %c0_6], %10 {strides = array<i32>} : memref<128x128xf32, #tpu.memory_space<vmem>>, vector<128x128xf32>,
    %c0_i32_7 = arith.constant 0 : i32
    %12 = arith.cmpi eq, %arg1, %c0_i32_7 : i32
    %13 = arith.extui %12 : i1 to i32
    %c0_i32_8 = arith.constant 0 : i32
    %14 = arith.cmpi ne, %13, %c0_i32_8 : i32
    scf.if %14 {
      %c0_9 = arith.constant 0 : index
      %c0_10 = arith.constant 0 : index
      %15 = vector.load %arg3[%c0_9, %c0_10] : memref<128x1xf32, #tpu.memory_space<vmem>>, vector<128x1xf32>
      %c0_11 = arith.constant 0 : index
      %c0_12 = arith.constant 0 : index
      %16 = vector.load %arg7[%c0_11, %c0_12] : memref<128x128xf32, #tpu.memory_space<vmem>>, vector<128x128xf32>
      %17 = vector.broadcast %15 : vector<128x1xf32> to vector<128x128xf32>
      %18 = arith.mulf %17, %16 : vector<128x128xf32>
      %c0_13 = arith.constant 0 : index
      %c0_14 = arith.constant 0 : index
      %19 = vector.load %arg5[%c0_13, %c0_14] : memref<1x128xf32, #tpu.memory_space<vmem>>, vector<1x128xf32>
      %20 = vector.broadcast %19 : vector<1x128xf32> to vector<128x128xf32>
      %21 = arith.addf %18, %20 : vector<128x128xf32>
      %cst_15 = arith.constant 0.000000e+00 : f32
      %22 = vector.broadcast %cst_15 : f32 to vector<128x128xf32>
      %23 = arith.maximumf %21, %22 : vector<128x128xf32>
      %24 = arith.truncf %23 : vector<128x128xf32> to vector<128x128xbf16>
      %c0_16 = arith.constant 0 : index
      %c0_17 = arith.constant 0 : index
      %25 = vector.load %arg6[%c0_16, %c0_17] : memref<128x128xbf16, #tpu.memory_space<vmem>>, vector<128x128xbf16>
      tpu.vector_store %arg6[%c0_16, %c0_17], %24 {strides = array<i32>} : memref<128x128xbf16, #tpu.memory_space<vmem>>, vector<128x128xbf16>,
    } else {
    }
    return
  }
  func.func @transform_0(%arg0: i32, %arg1: i32) -> (i32, i32) {
    %c0_i32 = arith.constant 0 : i32
    return %arg0, %arg1 : i32, i32
  }
  func.func @transform_1(%arg0: i32, %arg1: i32) -> (i32, i32) {
    %c0_i32 = arith.constant 0 : i32
    %c0_i32_0 = arith.constant 0 : i32
    return %arg0, %c0_i32 : i32, i32
  }
  func.func @transform_2(%arg0: i32, %arg1: i32) -> (i32, i32) {
    %c0_i32 = arith.constant 0 : i32
    %c0_i32_0 = arith.constant 0 : i32
    %c0_i32_1 = arith.constant 0 : i32
    return %c0_i32, %c0_i32_0 : i32, i32
  }
  func.func @transform_3(%arg0: i32, %arg1: i32) -> (i32, i32) {
    %c0_i32 = arith.constant 0 : i32
    %c0_i32_0 = arith.constant 0 : i32
    %c0_i32_1 = arith.constant 0 : i32
    return %c0_i32, %c0_i32_0 : i32, i32
  }
  func.func @transform_4(%arg0: i32, %arg1: i32) -> (i32, i32) {
    %c0_i32 = arith.constant 0 : i32
    %c0_i32_0 = arith.constant 0 : i32
    return %arg0, %c0_i32 : i32, i32
  }
}

</mosaic_0001>

<llo_original>
// kernel: tpu_custom_call.1
$region0: #{tpu_custom_call.1}
  #allocation0 [shape = 'u32[]', space=smem, size = 0x4, offset = 0x4, fixed_abs, tag = 'smem constant byte address 0x4 - core index']
  #allocation1 [shape = 'u32[144,128]{1,0:T(1,128)}', space=vmem, size = 0x12000, scoped, tag = 'internal scratch']
  #allocation2 [shape = 'f32[128,128]{1,0:T(8,128)}', space=vmem, size = 0x10000, scoped, tag = 'scratch operand']
  %s0 = inlined_call_operand.hbm [shape: bf16[128,128], index: 0, kind: input, shape index: {}]
  %s1 = inlined_call_operand.vmem [shape: f32[128,1], index: 1, kind: input, shape index: {}]
  %s2 = inlined_call_operand.vmem [shape: f32[128,128], index: 2, kind: input, shape index: {}]
  %s3 = inlined_call_operand.vmem [shape: f32[1,128], index: 3, kind: input, shape index: {}]
  %s4 = inlined_call_operand.hbm [shape: bf16[128,128], index: 4, kind: output, shape index: {}]
  %s5 = sld [smem:[#allocation0]]
  $region38: #{tpu_custom_call.1} parent=0
    _
  %s7 = ssub.s32 1, %s5
  %s8 = scalar_select 0, %s7, %s5
  $region1: #{tpu_custom_call.1} parent=0
    #allocation3 [shape = 'u8[32768]{0}', space=vmem, size = 0x8000, scoped, tag = 'input window, operand 0, single buffered']
    #allocation4 [shape = 's32[1]{0}', space=sflag, size = 0x4, scoped, tag = 'scoped memory for tpu_custom_call.1']
    #allocation5 [shape = 's32[1]{0}', space=sflag, size = 0x4, scoped, tag = 'scoped memory for tpu_custom_call.1']
    #allocation6 [shape = 'u8[32768]{0}', space=vmem, size = 0x8000, scoped, tag = 'output window, operand 0, single buffered']
    %9 = vsyncpa [#allocation4], 0
    %10 = vsyncpa [#allocation5], 0
    // Predicated region
    $region2: #{tpu_custom_call.1} parent=1 // pred_check
      _
    $region3: #{tpu_custom_call.1} parent=1 // pred_check_branch
      %12 = sbr.rel (0) target = $region5
    $region4: #{tpu_custom_call.1} parent=1 // pred_region
      %s14 = ssub.s32 1024, 1024
      %15 = vsyncadd [#allocation4], %s14
      %s16 = sshll.u32 [#allocation3], 4
      %s17 = int_to_ptr.vmem [resolvable:$true] %s16
      %22 = dma.hbm_to_vmem [thread:$0]  %s0, 1024, %s17, [#allocation4], 64, 64, 4
    $region5: #{tpu_custom_call.1} parent=1 // pred_fallthru
      _
    // Predicated region
    $region6: #{tpu_custom_call.1} parent=1 // pred_check
      _
    $region7: #{tpu_custom_call.1} parent=1 // pred_check_branch
      %24 = sbr.rel (0) target = $region9
    $region8: #{tpu_custom_call.1} parent=1 // pred_region
      _
    $region9: #{tpu_custom_call.1} parent=1 // pred_fallthru
      _
    // Predicated region
    $region10: #{tpu_custom_call.1} parent=1 // pred_check
      _
    $region11: #{tpu_custom_call.1} parent=1 // pred_check_branch
      %26 = sbr.rel (0) target = $region13
    $region12: #{tpu_custom_call.1} parent=1 // pred_region
      _
    $region13: #{tpu_custom_call.1} parent=1 // pred_fallthru
      _
    // Predicated region
    $region14: #{tpu_custom_call.1} parent=1 // pred_check
      _
    $region15: #{tpu_custom_call.1} parent=1 // pred_check_branch
      %28 = sbr.rel (0) target = $region17
    $region16: #{tpu_custom_call.1} parent=1 // pred_region
      _
    $region17: #{tpu_custom_call.1} parent=1 // pred_fallthru
      _
    // Predicated region
    $region18: #{tpu_custom_call.1} parent=1 // pred_check
      _
    $region19: #{tpu_custom_call.1} parent=1 // pred_check_branch
      %30 = sbr.rel (0) target = $region21
    $region20: #{tpu_custom_call.1} parent=1 // pred_region
      %31 = dma.done [#allocation4], 1024
    $region21: #{tpu_custom_call.1} parent=1 // pred_fallthru
      _
    %p33 = scmp.eq.s32.totalorder 0, 0
    // Predicated region
    $region22: #{tpu_custom_call.1} parent=1 // pred_check
      %p34 = pneg %p33
    $region23: #{tpu_custom_call.1} parent=1 // pred_check_branch
      %36 = sbr.rel (%p34) target = $region25
    $region24: #{tpu_custom_call.1} parent=1 // pred_region
      %37 = vst [vmem:[#allocation2] sm:$0xff] 0.0
      %38 = vst [vmem:[#allocation2 + $0x8] sm:$0xff] 0.0
      %39 = vst [vmem:[#allocation2 + $0x10] sm:$0xff] 0.0
      %40 = vst [vmem:[#allocation2 + $0x18] sm:$0xff] 0.0
      %41 = vst [vmem:[#allocation2 + $0x20] sm:$0xff] 0.0
      %42 = vst [vmem:[#allocation2 + $0x28] sm:$0xff] 0.0
      %43 = vst [vmem:[#allocation2 + $0x30] sm:$0xff] 0.0
      %44 = vst [vmem:[#allocation2 + $0x38] sm:$0xff] 0.0
      %45 = vst [vmem:[#allocation2 + $0x40] sm:$0xff] 0.0
      %46 = vst [vmem:[#allocation2 + $0x48] sm:$0xff] 0.0
      %47 = vst [vmem:[#allocation2 + $0x50] sm:$0xff] 0.0
      %48 = vst [vmem:[#allocation2 + $0x58] sm:$0xff] 0.0
      %49 = vst [vmem:[#allocation2 + $0x60] sm:$0xff] 0.0
      %50 = vst [vmem:[#allocation2 + $0x68] sm:$0xff] 0.0
      %51 = vst [vmem:[#allocation2 + $0x70] sm:$0xff] 0.0
      %52 = vst [vmem:[#allocation2 + $0x78] sm:$0xff] 0.0
    $region25: #{tpu_custom_call.1} parent=1 // pred_fallthru
      _
    %s53 = smul.u32 0, 128
    %s54 = scalar_lea.vmem %s2, %s53
    %v55 = vld [vmem:[%s54] sm:$0xff]
    %v56 = vld [vmem:[%s54 + $0x8] sm:$0xff]
    %v57 = vld [vmem:[%s54 + $0x10] sm:$0xff]
    %v58 = vld [vmem:[%s54 + $0x18] sm:$0xff]
    %v59 = vld [vmem:[%s54 + $0x20] sm:$0xff]
    %v60 = vld [vmem:[%s54 + $0x28] sm:$0xff]
    %v61 = vld [vmem:[%s54 + $0x30] sm:$0xff]
    %v62 = vld [vmem:[%s54 + $0x38] sm:$0xff]
    %v63 = vld [vmem:[%s54 + $0x40] sm:$0xff]
    %v64 = vld [vmem:[%s54 + $0x48] sm:$0xff]
    %v65 = vld [vmem:[%s54 + $0x50] sm:$0xff]
    %v66 = vld [vmem:[%s54 + $0x58] sm:$0xff]
    %v67 = vld [vmem:[%s54 + $0x60] sm:$0xff]
    %v68 = vld [vmem:[%s54 + $0x68] sm:$0xff]
    %v69 = vld [vmem:[%s54 + $0x70] sm:$0xff]
    %v70 = vld [vmem:[%s54 + $0x78] sm:$0xff]
    %v71 = vld [vmem:[#allocation2] sm:$0xff]
    %v72 = vld [vmem:[#allocation2 + $0x8] sm:$0xff]
    %v73 = vld [vmem:[#allocation2 + $0x10] sm:$0xff]
    %v74 = vld [vmem:[#allocation2 + $0x18] sm:$0xff]
    %v75 = vld [vmem:[#allocation2 + $0x20] sm:$0xff]
    %v76 = vld [vmem:[#allocation2 + $0x28] sm:$0xff]
    %v77 = vld [vmem:[#allocation2 + $0x30] sm:$0xff]
    %v78 = vld [vmem:[#allocation2 + $0x38] sm:$0xff]
    %v79 = vld [vmem:[#allocation2 + $0x40] sm:$0xff]
    %v80 = vld [vmem:[#allocation2 + $0x48] sm:$0xff]
    %v81 = vld [vmem:[#allocation2 + $0x50] sm:$0xff]
    %v82 = vld [vmem:[#allocation2 + $0x58] sm:$0xff]
    %v83 = vld [vmem:[#allocation2 + $0x60] sm:$0xff]
    %v84 = vld [vmem:[#allocation2 + $0x68] sm:$0xff]
    %v85 = vld [vmem:[#allocation2 + $0x70] sm:$0xff]
    %v86 = vld [vmem:[#allocation2 + $0x78] sm:$0xff]
    %v87 = vld [vmem:[#allocation3] sm:$0xf]
    %v88 = vld [vmem:[#allocation3 + $0x4] sm:$0xf]
    %v89 = vld [vmem:[#allocation3 + $0x8] sm:$0xf]
    %v90 = vld [vmem:[#allocation3 + $0xc] sm:$0xf]
    %v91 = vld [vmem:[#allocation3 + $0x10] sm:$0xf]
    %v92 = vld [vmem:[#allocation3 + $0x14] sm:$0xf]
    %v93 = vld [vmem:[#allocation3 + $0x18] sm:$0xf]
    %v94 = vld [vmem:[#allocation3 + $0x1c] sm:$0xf]
    %v95 = vld [vmem:[#allocation3 + $0x20] sm:$0xf]
    %v96 = vld [vmem:[#allocation3 + $0x24] sm:$0xf]
    %v97 = vld [vmem:[#allocation3 + $0x28] sm:$0xf]
    %v98 = vld [vmem:[#allocation3 + $0x2c] sm:$0xf]
    %v99 = vld [vmem:[#allocation3 + $0x30] sm:$0xf]
    %v100 = vld [vmem:[#allocation3 + $0x34] sm:$0xf]
    %v101 = vld [vmem:[#allocation3 + $0x38] sm:$0xf]
    %v102 = vld [vmem:[#allocation3 + $0x3c] sm:$0xf]
    %v119 = vunpack.c.l.b16 %v87
    %v120 = vunpack.c.l.b16 %v88
    %v121 = vunpack.c.l.b16 %v89
    %v122 = vunpack.c.l.b16 %v90
    %v123 = vunpack.c.l.b16 %v91
    %v124 = vunpack.c.l.b16 %v92
    %v125 = vunpack.c.l.b16 %v93
    %v126 = vunpack.c.l.b16 %v94
    %v127 = vunpack.c.l.b16 %v95
    %v128 = vunpack.c.l.b16 %v96
    %v129 = vunpack.c.l.b16 %v97
    %v130 = vunpack.c.l.b16 %v98
    %v131 = vunpack.c.l.b16 %v99
    %v132 = vunpack.c.l.b16 %v100
    %v133 = vunpack.c.l.b16 %v101
    %v134 = vunpack.c.l.b16 %v102
    %v135 = vpack.c.b16 %v120, %v119
    %v136 = vpack.c.b16 %v122, %v121
    %v137 = vpack.c.b16 %v124, %v123
    %v138 = vpack.c.b16 %v126, %v125
    %v139 = vpack.c.b16 %v128, %v127
    %v140 = vpack.c.b16 %v130, %v129
    %v141 = vpack.c.b16 %v132, %v131
    %v142 = vpack.c.b16 %v134, %v133
    %151 = vmatprep.subr.mxu0 0.0
    %152 = vmatpush1.msra.mxu0 %v55
    %153 = vmatprep.subr.mxu0 0.0
    %154 = vmatpush1.msra.mxu0 %v56
    %155 = vmatprep.subr.mxu0 0.0
    %156 = vmatpush1.msra.mxu0 %v57
    %157 = vmatprep.subr.mxu0 0.0
    %158 = vmatpush1.msra.mxu0 %v58
    %159 = vmatprep.subr.mxu0 0.0
    %160 = vmatpush1.msra.mxu0 %v59
    %161 = vmatprep.subr.mxu0 0.0
    %162 = vmatpush1.msra.mxu0 %v60
    %163 = vmatprep.subr.mxu0 0.0
    %164 = vmatpush1.msra.mxu0 %v61
    %165 = vmatprep.subr.mxu0 0.0
    %166 = vmatpush1.msra.mxu0 %v62
    %167 = vmatprep.subr.mxu0 0.0
    %168 = vmatpush1.msra.mxu0 %v63
    %169 = vmatprep.subr.mxu0 0.0
    %170 = vmatpush1.msra.mxu0 %v64
    %171 = vmatprep.subr.mxu0 0.0
    %172 = vmatpush1.msra.mxu0 %v65
    %173 = vmatprep.subr.mxu0 0.0
    %174 = vmatpush1.msra.mxu0 %v66
    %175 = vmatprep.subr.mxu0 0.0
    %176 = vmatpush1.msra.mxu0 %v67
    %177 = vmatprep.subr.mxu0 0.0
    %178 = vmatpush1.msra.mxu0 %v68
    %179 = vmatprep.subr.mxu0 0.0
    %180 = vmatpush1.msra.mxu0 %v69
    %181 = vmatprep.subr.mxu0 0.0
    %182 = vmatpush1.msra.mxu0 %v70
    %183 = vmatprep.subr.mxu0 0.0
    %184 = vmatpush1.msra.mxu0 0.0
    %185 = vmatprep.subr.mxu0 0.0
    %186 = vmatpush1.msra.mxu0 0.0
    %187 = vmatprep.subr.mxu0 0.0
    %188 = vmatpush1.msra.mxu0 0.0
    %189 = vmatprep.subr.mxu0 0.0
    %190 = vmatpush1.msra.mxu0 0.0
    %191 = vmatprep.subr.mxu0 0.0
    %192 = vmatpush1.msra.mxu0 0.0
    %193 = vmatprep.subr.mxu0 0.0
    %194 = vmatpush1.msra.mxu0 0.0
    %195 = vmatprep.subr.mxu0 0.0
    %196 = vmatpush1.msra.mxu0 0.0
    %197 = vmatprep.subr.mxu0 0.0
    %198 = vmatpush1.msra.mxu0 0.0
    %199 = vmatprep.subr.mxu0 0.0
    %200 = vmatpush1.msra.mxu0 0.0
    %201 = vmatprep.subr.mxu0 0.0
    %202 = vmatpush1.msra.mxu0 0.0
    %203 = vmatprep.subr.mxu0 0.0
    %204 = vmatpush1.msra.mxu0 0.0
    %205 = vmatprep.subr.mxu0 0.0
    %206 = vmatpush1.msra.mxu0 0.0
    %207 = vmatprep.subr.mxu0 0.0
    %208 = vmatpush1.msra.mxu0 0.0
    %209 = vmatprep.subr.mxu0 0.0
    %210 = vmatpush1.msra.mxu0 0.0
    %211 = vmatprep.subr.mxu0 0.0
    %212 = vmatpush1.msra.mxu0 0.0
    %213 = vmatprep.subr.mxu0 0.0
    %214 = vmatpush1.msra.mxu0 0.0
    %215 = vmatprep.mubr.bf16.mxu0 0
    %216 = vmatmul.mubr.bf16.gmra.mrb[0].mxu0 %v135
    %v217 = vpop.f32.mrb[0].mxu0
    %v218 = vadd.f32 0.0, %v217
    %v219 = vpop.f32.mrb[0].mxu0
    %v220 = vpop.f32.mrb[0].mxu0
    %v221 = vadd.f32 0.0, %v220
    %v222 = vpop.f32.mrb[0].mxu0
    %223 = vmatprep.mubr.bf16.mxu0 0
    %224 = vmatmul.mubr.bf16.gmra.mrb[0].mxu0 %v136
    %v225 = vpop.f32.mrb[0].mxu0
    %v226 = vadd.f32 0.0, %v225
    %v227 = vpop.f32.mrb[0].mxu0
    %v228 = vpop.f32.mrb[0].mxu0
    %v229 = vadd.f32 0.0, %v228
    %v230 = vpop.f32.mrb[0].mxu0
    %231 = vmatprep.mubr.bf16.mxu0 0
    %232 = vmatmul.mubr.bf16.gmra.mrb[0].mxu0 %v137
    %v233 = vpop.f32.mrb[0].mxu0
    %v234 = vadd.f32 0.0, %v233
    %v235 = vpop.f32.mrb[0].mxu0
    %v236 = vpop.f32.mrb[0].mxu0
    %v237 = vadd.f32 0.0, %v236
    %v238 = vpop.f32.mrb[0].mxu0
    %239 = vmatprep.mubr.bf16.mxu0 0
    %240 = vmatmul.mubr.bf16.gmra.mrb[0].mxu0 %v138
    %v241 = vpop.f32.mrb[0].mxu0
    %v242 = vadd.f32 0.0, %v241
    %v243 = vpop.f32.mrb[0].mxu0
    %v244 = vpop.f32.mrb[0].mxu0
    %v245 = vadd.f32 0.0, %v244
    %v246 = vpop.f32.mrb[0].mxu0
    %247 = vmatprep.mubr.bf16.mxu0 0
    %248 = vmatmul.mubr.bf16.gmra.mrb[0].mxu0 %v139
    %v249 = vpop.f32.mrb[0].mxu0
    %v250 = vadd.f32 0.0, %v249
    %v251 = vpop.f32.mrb[0].mxu0
    %v252 = vpop.f32.mrb[0].mxu0
    %v253 = vadd.f32 0.0, %v252
    %v254 = vpop.f32.mrb[0].mxu0
    %255 = vmatprep.mubr.bf16.mxu0 0
    %256 = vmatmul.mubr.bf16.gmra.mrb[0].mxu0 %v140
    %v257 = vpop.f32.mrb[0].mxu0
    %v258 = vadd.f32 0.0, %v257
    %v259 = vpop.f32.mrb[0].mxu0
    %v260 = vpop.f32.mrb[0].mxu0
    %v261 = vadd.f32 0.0, %v260
    %v262 = vpop.f32.mrb[0].mxu0
    %263 = vmatprep.mubr.bf16.mxu0 0
    %264 = vmatmul.mubr.bf16.gmra.mrb[0].mxu0 %v141
    %v265 = vpop.f32.mrb[0].mxu0
    %v266 = vadd.f32 0.0, %v265
    %v267 = vpop.f32.mrb[0].mxu0
    %v268 = vpop.f32.mrb[0].mxu0
    %v269 = vadd.f32 0.0, %v268
    %v270 = vpop.f32.mrb[0].mxu0
    %271 = vmatprep.mubr.bf16.mxu0 0
    %272 = vmatmul.mubr.bf16.gmra.mrb[0].mxu0 %v142
    %v273 = vpop.f32.mrb[0].mxu0
    %v274 = vadd.f32 0.0, %v273
    %v275 = vpop.f32.mrb[0].mxu0
    %v276 = vpop.f32.mrb[0].mxu0
    %v277 = vadd.f32 0.0, %v276
    %v278 = vpop.f32.mrb[0].mxu0
    %279 = vdwg.mxu0
    %v280 = vadd.f32 %v71, %v218
    %v281 = vadd.f32 %v72, %v221
    %v282 = vadd.f32 %v73, %v226
    %v283 = vadd.f32 %v74, %v229
    %v284 = vadd.f32 %v75, %v234
    %v285 = vadd.f32 %v76, %v237
    %v286 = vadd.f32 %v77, %v242
    %v287 = vadd.f32 %v78, %v245
    %v288 = vadd.f32 %v79, %v250
    %v289 = vadd.f32 %v80, %v253
    %v290 = vadd.f32 %v81, %v258
    %v291 = vadd.f32 %v82, %v261
    %v292 = vadd.f32 %v83, %v266
    %v293 = vadd.f32 %v84, %v269
    %v294 = vadd.f32 %v85, %v274
    %v295 = vadd.f32 %v86, %v277
    %296 = vst [vmem:[#allocation2] sm:$0xff] %v280
    %297 = vst [vmem:[#allocation2 + $0x8] sm:$0xff] %v281
    %298 = vst [vmem:[#allocation2 + $0x10] sm:$0xff] %v282
    %299 = vst [vmem:[#allocation2 + $0x18] sm:$0xff] %v283
    %300 = vst [vmem:[#allocation2 + $0x20] sm:$0xff] %v284
    %301 = vst [vmem:[#allocation2 + $0x28] sm:$0xff] %v285
    %302 = vst [vmem:[#allocation2 + $0x30] sm:$0xff] %v286
    %303 = vst [vmem:[#allocation2 + $0x38] sm:$0xff] %v287
    %304 = vst [vmem:[#allocation2 + $0x40] sm:$0xff] %v288
    %305 = vst [vmem:[#allocation2 + $0x48] sm:$0xff] %v289
    %306 = vst [vmem:[#allocation2 + $0x50] sm:$0xff] %v290
    %307 = vst [vmem:[#allocation2 + $0x58] sm:$0xff] %v291
    %308 = vst [vmem:[#allocation2 + $0x60] sm:$0xff] %v292
    %309 = vst [vmem:[#allocation2 + $0x68] sm:$0xff] %v293
    %310 = vst [vmem:[#allocation2 + $0x70] sm:$0xff] %v294
    %311 = vst [vmem:[#allocation2 + $0x78] sm:$0xff] %v295
    // Predicated region
    $region26: #{tpu_custom_call.1} parent=1 // pred_check
      %p312 = pneg %p33
    $region27: #{tpu_custom_call.1} parent=1 // pred_check_branch
      %314 = sbr.rel (%p312) target = $region29
    $region28: #{tpu_custom_call.1} parent=1 // pred_region
      %v315 = vld [vmem:[%s1] sm:$0xff]
      %v316 = vld [vmem:[%s1 + $0x8] sm:$0xff]
      %v317 = vld [vmem:[%s1 + $0x10] sm:$0xff]
      %v318 = vld [vmem:[%s1 + $0x18] sm:$0xff]
      %v319 = vld [vmem:[%s1 + $0x20] sm:$0xff]
      %v320 = vld [vmem:[%s1 + $0x28] sm:$0xff]
      %v321 = vld [vmem:[%s1 + $0x30] sm:$0xff]
      %v322 = vld [vmem:[%s1 + $0x38] sm:$0xff]
      %v323 = vld [vmem:[%s1 + $0x40] sm:$0xff]
      %v324 = vld [vmem:[%s1 + $0x48] sm:$0xff]
      %v325 = vld [vmem:[%s1 + $0x50] sm:$0xff]
      %v326 = vld [vmem:[%s1 + $0x58] sm:$0xff]
      %v327 = vld [vmem:[%s1 + $0x60] sm:$0xff]
      %v328 = vld [vmem:[%s1 + $0x68] sm:$0xff]
      %v329 = vld [vmem:[%s1 + $0x70] sm:$0xff]
      %v330 = vld [vmem:[%s1 + $0x78] sm:$0xff]
      %v331 = vld [vmem:[#allocation2] sm:$0xff]
      %v332 = vld [vmem:[#allocation2 + $0x8] sm:$0xff]
      %v333 = vld [vmem:[#allocation2 + $0x10] sm:$0xff]
      %v334 = vld [vmem:[#allocation2 + $0x18] sm:$0xff]
      %v335 = vld [vmem:[#allocation2 + $0x20] sm:$0xff]
      %v336 = vld [vmem:[#allocation2 + $0x28] sm:$0xff]
      %v337 = vld [vmem:[#allocation2 + $0x30] sm:$0xff]
      %v338 = vld [vmem:[#allocation2 + $0x38] sm:$0xff]
      %v339 = vld [vmem:[#allocation2 + $0x40] sm:$0xff]
      %v340 = vld [vmem:[#allocation2 + $0x48] sm:$0xff]
      %v341 = vld [vmem:[#allocation2 + $0x50] sm:$0xff]
      %v342 = vld [vmem:[#allocation2 + $0x58] sm:$0xff]
      %v343 = vld [vmem:[#allocation2 + $0x60] sm:$0xff]
      %v344 = vld [vmem:[#allocation2 + $0x68] sm:$0xff]
      %v345 = vld [vmem:[#allocation2 + $0x70] sm:$0xff]
      %v346 = vld [vmem:[#allocation2 + $0x78] sm:$0xff]
      %348 = vset.pattern.permute.xlu0 0
      %349 = vperm.xlu0 %348, %v315
      %v350 = vpop.permute.xlu0 %349
      %353 = vset.pattern.permute.xlu0 0
      %354 = vperm.xlu0 %353, %v316
      %v355 = vpop.permute.xlu0 %354
      %358 = vset.pattern.permute.xlu0 0
      %359 = vperm.xlu0 %358, %v317
      %v360 = vpop.permute.xlu0 %359
      %363 = vset.pattern.permute.xlu0 0
      %364 = vperm.xlu0 %363, %v318
      %v365 = vpop.permute.xlu0 %364
      %368 = vset.pattern.permute.xlu0 0
      %369 = vperm.xlu0 %368, %v319
      %v370 = vpop.permute.xlu0 %369
      %373 = vset.pattern.permute.xlu0 0
      %374 = vperm.xlu0 %373, %v320
      %v375 = vpop.permute.xlu0 %374
      %378 = vset.pattern.permute.xlu0 0
      %379 = vperm.xlu0 %378, %v321
      %v380 = vpop.permute.xlu0 %379
      %383 = vset.pattern.permute.xlu0 0
      %384 = vperm.xlu0 %383, %v322
      %v385 = vpop.permute.xlu0 %384
      %388 = vset.pattern.permute.xlu0 0
      %389 = vperm.xlu0 %388, %v323
      %v390 = vpop.permute.xlu0 %389
      %393 = vset.pattern.permute.xlu0 0
      %394 = vperm.xlu0 %393, %v324
      %v395 = vpop.permute.xlu0 %394
      %398 = vset.pattern.permute.xlu0 0
      %399 = vperm.xlu0 %398, %v325
      %v400 = vpop.permute.xlu0 %399
      %403 = vset.pattern.permute.xlu0 0
      %404 = vperm.xlu0 %403, %v326
      %v405 = vpop.permute.xlu0 %404
      %408 = vset.pattern.permute.xlu0 0
      %409 = vperm.xlu0 %408, %v327
      %v410 = vpop.permute.xlu0 %409
      %413 = vset.pattern.permute.xlu0 0
      %414 = vperm.xlu0 %413, %v328
      %v415 = vpop.permute.xlu0 %414
      %418 = vset.pattern.permute.xlu0 0
      %419 = vperm.xlu0 %418, %v329
      %v420 = vpop.permute.xlu0 %419
      %423 = vset.pattern.permute.xlu0 0
      %424 = vperm.xlu0 %423, %v330
      %v425 = vpop.permute.xlu0 %424
      %v427 = vmul.f32 %v350, %v331
      %v428 = vmul.f32 %v355, %v332
      %v429 = vmul.f32 %v360, %v333
      %v430 = vmul.f32 %v365, %v334
      %v431 = vmul.f32 %v370, %v335
      %v432 = vmul.f32 %v375, %v336
      %v433 = vmul.f32 %v380, %v337
      %v434 = vmul.f32 %v385, %v338
      %v435 = vmul.f32 %v390, %v339
      %v436 = vmul.f32 %v395, %v340
      %v437 = vmul.f32 %v400, %v341
      %v438 = vmul.f32 %v405, %v342
      %v439 = vmul.f32 %v410, %v343
      %v440 = vmul.f32 %v415, %v344
      %v441 = vmul.f32 %v420, %v345
      %v442 = vmul.f32 %v425, %v346
      %v443 = vld [vmem:[%s3] sm:$0x1]
      %v445 = vlaneseq
      %v446 = vshrl.u32 %v445, 7
      %v447 = vsub.s32 0, %v446
      %v448 = vrot.slane %v443, %v447
      %v450 = vadd.f32 %v427, %v448
      %v451 = vadd.f32 %v428, %v448
      %v452 = vadd.f32 %v429, %v448
      %v453 = vadd.f32 %v430, %v448
      %v454 = vadd.f32 %v431, %v448
      %v455 = vadd.f32 %v432, %v448
      %v456 = vadd.f32 %v433, %v448
      %v457 = vadd.f32 %v434, %v448
      %v458 = vadd.f32 %v435, %v448
      %v459 = vadd.f32 %v436, %v448
      %v460 = vadd.f32 %v437, %v448
      %v461 = vadd.f32 %v438, %v448
      %v462 = vadd.f32 %v439, %v448
      %v463 = vadd.f32 %v440, %v448
      %v464 = vadd.f32 %v441, %v448
      %v465 = vadd.f32 %v442, %v448
      %v466 = vmax.f32 %v450, 0.0
      %v467 = vmax.f32 %v451, 0.0
      %v468 = vmax.f32 %v452, 0.0
      %v469 = vmax.f32 %v453, 0.0
      %v470 = vmax.f32 %v454, 0.0
      %v471 = vmax.f32 %v455, 0.0
      %v472 = vmax.f32 %v456, 0.0
      %v473 = vmax.f32 %v457, 0.0
      %v474 = vmax.f32 %v458, 0.0
      %v475 = vmax.f32 %v459, 0.0
      %v476 = vmax.f32 %v460, 0.0
      %v477 = vmax.f32 %v461, 0.0
      %v478 = vmax.f32 %v462, 0.0
      %v479 = vmax.f32 %v463, 0.0
      %v480 = vmax.f32 %v464, 0.0
      %v481 = vmax.f32 %v465, 0.0
      %v482 = vpack.c.bf16 %v467, %v466
      %v483 = vpack.c.bf16 %v469, %v468
      %v484 = vpack.c.bf16 %v471, %v470
      %v485 = vpack.c.bf16 %v473, %v472
      %v486 = vpack.c.bf16 %v475, %v474
      %v487 = vpack.c.bf16 %v477, %v476
      %v488 = vpack.c.bf16 %v479, %v478
      %v489 = vpack.c.bf16 %v481, %v480
      %v498 = vunpack.c.l.b16 %v482
      %v499 = vunpack.c.h.b16 %v482
      %v500 = vunpack.c.l.b16 %v483
      %v501 = vunpack.c.h.b16 %v483
      %v502 = vunpack.c.l.b16 %v484
      %v503 = vunpack.c.h.b16 %v484
      %v504 = vunpack.c.l.b16 %v485
      %v505 = vunpack.c.h.b16 %v485
      %v506 = vunpack.c.l.b16 %v486
      %v507 = vunpack.c.h.b16 %v486
      %v508 = vunpack.c.l.b16 %v487
      %v509 = vunpack.c.h.b16 %v487
      %v510 = vunpack.c.l.b16 %v488
      %v511 = vunpack.c.h.b16 %v488
      %v512 = vunpack.c.l.b16 %v489
      %v513 = vunpack.c.h.b16 %v489
      %v514 = vpack.c.b16 %v498, %v498
      %v515 = vpack.c.b16 %v499, %v499
      %v516 = vpack.c.b16 %v500, %v500
      %v517 = vpack.c.b16 %v501, %v501
      %v518 = vpack.c.b16 %v502, %v502
      %v519 = vpack.c.b16 %v503, %v503
      %v520 = vpack.c.b16 %v504, %v504
      %v521 = vpack.c.b16 %v505, %v505
      %v522 = vpack.c.b16 %v506, %v506
      %v523 = vpack.c.b16 %v507, %v507
      %v524 = vpack.c.b16 %v508, %v508
      %v525 = vpack.c.b16 %v509, %v509
      %v526 = vpack.c.b16 %v510, %v510
      %v527 = vpack.c.b16 %v511, %v511
      %v528 = vpack.c.b16 %v512, %v512
      %v529 = vpack.c.b16 %v513, %v513
      %546 = vst [vmem:[#allocation6] sm:$0xf] %v514
      %547 = vst [vmem:[#allocation6 + $0x4] sm:$0xf] %v515
      %548 = vst [vmem:[#allocation6 + $0x8] sm:$0xf] %v516
      %549 = vst [vmem:[#allocation6 + $0xc] sm:$0xf] %v517
      %550 = vst [vmem:[#allocation6 + $0x10] sm:$0xf] %v518
      %551 = vst [vmem:[#allocation6 + $0x14] sm:$0xf] %v519
      %552 = vst [vmem:[#allocation6 + $0x18] sm:$0xf] %v520
      %553 = vst [vmem:[#allocation6 + $0x1c] sm:$0xf] %v521
      %554 = vst [vmem:[#allocation6 + $0x20] sm:$0xf] %v522
      %555 = vst [vmem:[#allocation6 + $0x24] sm:$0xf] %v523
      %556 = vst [vmem:[#allocation6 + $0x28] sm:$0xf] %v524
      %557 = vst [vmem:[#allocation6 + $0x2c] sm:$0xf] %v525
      %558 = vst [vmem:[#allocation6 + $0x30] sm:$0xf] %v526
      %559 = vst [vmem:[#allocation6 + $0x34] sm:$0xf] %v527
      %560 = vst [vmem:[#allocation6 + $0x38] sm:$0xf] %v528
      %561 = vst [vmem:[#allocation6 + $0x3c] sm:$0xf] %v529
    $region29: #{tpu_custom_call.1} parent=1 // pred_fallthru
      _
    // Predicated region
    $region30: #{tpu_custom_call.1} parent=1 // pred_check
      _
    $region31: #{tpu_custom_call.1} parent=1 // pred_check_branch
      %563 = sbr.rel (0) target = $region33
    $region32: #{tpu_custom_call.1} parent=1 // pred_region
      %s565 = ssub.s32 1024, 1024
      %566 = vsyncadd [#allocation5], %s565
      %s567 = sshll.u32 [#allocation6], 4
      %s568 = int_to_ptr.vmem [resolvable:$true] %s567
      %573 = dma.vmem_to_hbm [thread:$0]  %s568, 1024, %s4, [#allocation5], 64, 64, 4
    $region33: #{tpu_custom_call.1} parent=1 // pred_fallthru
      _
    // Predicated region
    $region34: #{tpu_custom_call.1} parent=1 // pred_check
      _
    $region35: #{tpu_custom_call.1} parent=1 // pred_check_branch
      %575 = sbr.rel (0) target = $region37
    $region36: #{tpu_custom_call.1} parent=1 // pred_region
      %576 = dma.done [#allocation5], 1024
    $region37: #{tpu_custom_call.1} parent=1 // pred_fallthru
      _
    %577 = vsyncpa [#allocation4], 1
    %578 = vsyncpa [#allocation5], 1

</llo_original>
